<compile_context>
chip_gen: v6e
topology: v6e:2x2x1
jax: 0.10.0
libtpu: 0.0.40
codegen_flags: <defaults>
</compile_context>

<pallas_src>
import jax
import jax.numpy as jnp
from jax import lax
from jax.experimental import pallas as pl
from jax.experimental.pallas import tpu as pltpu


def _round_up(x, m):
    return ((x + m - 1) // m) * m


def _logreg_kernel(x_ref, w_ref, o_ref):
    # x_ref: (B, D), w_ref: (tO, D), o_ref: (B, tO)
    x = x_ref[...]
    w = w_ref[...]

    # MXU matmul in NT form: contract the last dim of BOTH operands, so no
    # in-kernel transpose / relayout of the weight tile is needed.
    logits = lax.dot_general(
        x, w,
        dimension_numbers=(((1,), (1,)), ((), ())),
        preferred_element_type=jnp.float32,
    )                                                        # (B, tO) f32

    # Numerically-stable softmax over dim=0 (the batch axis).  Exact division
    # (not approx reciprocal): the denominator is only a (1, tO) row, so the
    # approx path buys nothing and costs column-sum accuracy.
    m = jnp.max(logits, axis=0, keepdims=True)               # (1, tO)
    e = jnp.exp(logits - m)                                   # (B, tO)
    denom = jnp.sum(e, axis=0, keepdims=True)                 # (1, tO)
    o_ref[...] = (e / denom).astype(o_ref.dtype)


def logistic_regression_forward(x, weight, bias=None, *, tile_o=None,
                                operand_dtype=jnp.bfloat16):
    """x: (B, in_dim), weight: (out_dim, in_dim), bias: (out_dim,) or None.

    Returns softmax(x @ weight.T + bias, axis=0) in float32.
    NOTE: bias is accepted for API parity with nn.Linear but is not used:
    a per-column additive constant cancels exactly under softmax over dim=0.
    """
    B, D = x.shape
    O, D2 = weight.shape
    assert D == D2
    if bias is not None:
        assert bias.shape == (O,)
    del bias  # exact no-op under softmax along the batch axis

    xo = x.astype(operand_dtype)
    wo = weight.astype(operand_dtype)
    itemsize = jnp.dtype(operand_dtype).itemsize

    # ---- tile_o selection -------------------------------------------------
    # Small O: one full-extent block (no padding, grid=(1,)).
    # Large O: lane-dense tile (multiple of 128), capped by a VMEM budget that
    # is safe on v7x (64 MiB physical), and guaranteeing >= 2 grid steps so
    # ("parallel",) actually shards across v7x's two TensorCores.
    if tile_o is None:
        if O <= 256:
            tile_o = O
        else:
            vmem_budget = 40 * 1024 * 1024
            tile_o = 512
            while tile_o > 128:
                need = (2 * B * D * itemsize          # x (pipeline-buffered)
                        + 2 * tile_o * D * itemsize   # weight tile, double-buffered
                        + 2 * B * tile_o * 4)         # f32 output tile, double-buffered
                if need <= vmem_budget and pl.cdiv(O, tile_o) >= 2:
                    break
                tile_o //= 2

    # Pad the weight along O only if tiling requires it (fast path: no copy).
    if O % tile_o:
        Op = _round_up(O, tile_o)
        wp = jnp.zeros((Op, D), operand_dtype).at[:O, :].set(wo)
    else:
        Op = O
        wp = wo

    grid = (Op // tile_o,)

    out = pl.pallas_call(
        _logreg_kernel,
        out_shape=jax.ShapeDtypeStruct((B, Op), jnp.float32),
        grid=grid,
        in_specs=[
            pl.BlockSpec((B, D), lambda j: (0, 0)),        # x: resident, full extent
            pl.BlockSpec((tile_o, D), lambda j: (j, 0)),   # weight: streamed over O
        ],
        out_specs=pl.BlockSpec((B, tile_o), lambda j: (0, j)),
        compiler_params=pltpu.CompilerParams(
            dimension_semantics=("parallel",),             # v7x: 2 TCs split O-tiles
            vmem_limit_bytes=48 * 1024 * 1024,             # lift v5e's 16 MiB default
        ),
    )(xo, wp)

    return out if Op == O else out[:, :O]


def _reference_f32(x, weight, bias):
    logits = x @ weight.T + bias[None, :]
    m = jnp.max(logits, axis=0, keepdims=True)
    e = jnp.exp(logits - m)
    return e / jnp.sum(e, axis=0, keepdims=True)


if __name__ == "__main__":
    # Small, deterministic shapes consistent with the module:
    # batch=8, in_dim=32, out_dim=16
    B, IN_DIM, OUT_DIM = 8, 32, 16

    key = jax.random.PRNGKey(0)
    kx, kw, kb = jax.random.split(key, 3)

    x = jax.random.normal(kx, (B, IN_DIM), dtype=jnp.float32)

    # PyTorch nn.Linear default init: U(-1/sqrt(in_dim), 1/sqrt(in_dim))
    bound = 1.0 / (IN_DIM ** 0.5)
    weight = jax.random.uniform(kw, (OUT_DIM, IN_DIM), jnp.float32, -bound, bound)
    bias = jax.random.uniform(kb, (OUT_DIM,), jnp.float32, -bound, bound)

    out = jax.block_until_ready(logistic_regression_forward(x, weight, bias))
    assert out.shape == (B, OUT_DIM)

    # (1) Tight check against a reference that uses the same bf16 operand
    #     rounding as the kernel's MXU matmul (isolates kernel-logic errors).
    logits_bf16 = jnp.dot(x.astype(jnp.bfloat16), weight.astype(jnp.bfloat16).T,
                          preferred_element_type=jnp.float32)
    ref_bf16 = jax.nn.softmax(logits_bf16, axis=0)
    assert jnp.allclose(out, ref_bf16, atol=1e-4), float(
        jnp.max(jnp.abs(out - ref_bf16)))

    # (2) Semantics check against the full-f32 PyTorch-equivalent reference
    #     (tolerance reflects bf16 operand precision of the matmul only).
    ref_f32 = _reference_f32(x, weight, bias)
    assert jnp.allclose(out, ref_f32, atol=5e-3, rtol=2e-2), float(
        jnp.max(jnp.abs(out - ref_f32)))

    # (3) Softmax over dim=0 with exact division => columns sum to 1.
    assert jnp.allclose(jnp.sum(out, axis=0), jnp.ones((OUT_DIM,)), atol=1e-5)

    print("KERNEL_OK")
</pallas_src>

<mosaic_0001>
module attributes {stable_mosaic.version = 11 : i64} {
  func.func @_logreg_kernel(%arg0: i32, %arg1: memref<8x32xbf16, #tpu.memory_space<vmem>>, %arg2: memref<16x32xbf16, #tpu.memory_space<vmem>>, %arg3: memref<8x16xf32, #tpu.memory_space<vmem>>) attributes {dimension_semantics = [#tpu.dimension_semantics<parallel>], iteration_bounds = array<i64: 1>, scalar_prefetch = 0 : i64, scratch_operands = 0 : i64, tpu.core_type = #tpu.core_type<tc>, window_params = [{pipeline_mode = #tpu.pipeline_mode<synchronous>, transform_indices = @transform_0, window_bounds = array<i64: 8, 32>}, {transform_indices = @transform_1, window_bounds = array<i64: 16, 32>}, {transform_indices = @transform_2, window_bounds = array<i64: 8, 16>}]} {
    %c0 = arith.constant 0 : index
    %c0_0 = arith.constant 0 : index
    %0 = vector.load %arg1[%c0, %c0_0] : memref<8x32xbf16, #tpu.memory_space<vmem>>, vector<8x32xbf16>
    %c0_1 = arith.constant 0 : index
    %c0_2 = arith.constant 0 : index
    %1 = vector.load %arg2[%c0_1, %c0_2] : memref<16x32xbf16, #tpu.memory_space<vmem>>, vector<16x32xbf16>
    %cst = arith.constant dense<0.000000e+00> : vector<8x16xf32>
    %2 = tpu.matmul %0, %1, %cst {dimension_numbers = #tpu.dot_dimension_numbers<[1], [1], [0], [0], [0, 0, 1, 0], [], []>} : vector<8x32xbf16>, vector<16x32xbf16>, vector<8x16xf32> -> vector<8x16xf32>
    %cst_3 = arith.constant dense<0xFF800000> : vector<16xf32>
    %3 = vector.multi_reduction <maximumf>, %2, %cst_3 [0] : vector<8x16xf32> to vector<16xf32>
    %4 = vector.shape_cast %3 : vector<16xf32> to vector<1x16xf32>
    %5 = vector.broadcast %4 : vector<1x16xf32> to vector<8x16xf32>
    %6 = arith.subf %2, %5 : vector<8x16xf32>
    %7 = math.exp %6 : vector<8x16xf32>
    %cst_4 = arith.constant dense<0.000000e+00> : vector<16xf32>
    %8 = vector.multi_reduction <add>, %7, %cst_4 [0] : vector<8x16xf32> to vector<16xf32>
    %9 = vector.shape_cast %8 : vector<16xf32> to vector<1x16xf32>
    %10 = vector.broadcast %9 : vector<1x16xf32> to vector<8x16xf32>
    %11 = arith.divf %7, %10 : vector<8x16xf32>
    %c0_5 = arith.constant 0 : index
    %c0_6 = arith.constant 0 : index
    %12 = vector.load %arg3[%c0_5, %c0_6] : memref<8x16xf32, #tpu.memory_space<vmem>>, vector<8x16xf32>
    tpu.vector_store %arg3[%c0_5, %c0_6], %11 {strides = array<i32>} : memref<8x16xf32, #tpu.memory_space<vmem>>, vector<8x16xf32>,
    return
  }
  func.func @transform_0(%arg0: i32) -> (i32, i32) {
    %c0_i32 = arith.constant 0 : i32
    %c0_i32_0 = arith.constant 0 : i32
    %c0_i32_1 = arith.constant 0 : i32
    return %c0_i32, %c0_i32_0 : i32, i32
  }
  func.func @transform_1(%arg0: i32) -> (i32, i32) {
    %c0_i32 = arith.constant 0 : i32
    %c0_i32_0 = arith.constant 0 : i32
    return %arg0, %c0_i32 : i32, i32
  }
  func.func @transform_2(%arg0: i32) -> (i32, i32) {
    %c0_i32 = arith.constant 0 : i32
    %c0_i32_0 = arith.constant 0 : i32
    return %c0_i32, %arg0 : i32, i32
  }
}

</mosaic_0001>

<llo_original>
// kernel: tpu_custom_call.1
$region0: #{tpu_custom_call.1}
  #allocation0 [shape = 'u32[]', space=smem, size = 0x4, offset = 0x4, fixed_abs, tag = 'smem constant byte address 0x4 - core index']
  #allocation1 [shape = 'u32[144,128]{1,0:T(1,128)}', space=vmem, size = 0x12000, scoped, tag = 'internal scratch']
  %s0 = inlined_call_operand.hbm [shape: bf16[8,32], index: 0, kind: input, shape index: {}]
  %s1 = inlined_call_operand.hbm [shape: bf16[16,32], index: 1, kind: input, shape index: {}]
  %s2 = inlined_call_operand.hbm [shape: f32[8,16], index: 2, kind: output, shape index: {}]
  %s3 = sld [smem:[#allocation0]]
  $region26: #{tpu_custom_call.1} parent=0
    _
  %s5 = ssub.s32 1, %s3
  %s6 = scalar_select 0, %s5, %s3
  $region1: #{tpu_custom_call.1} parent=0
    #allocation2 [shape = 'u8[2048]{0}', space=vmem, size = 0x800, scoped, tag = 'input window, operand 0, single buffered']
    #allocation3 [shape = 's32[1]{0}', space=sflag, size = 0x4, scoped, tag = 'scoped memory for tpu_custom_call.1']
    #allocation4 [shape = 's32[1]{0}', space=sflag, size = 0x4, scoped, tag = 'scoped memory for tpu_custom_call.1']
    #allocation5 [shape = 'u8[4096]{0}', space=vmem, size = 0x1000, scoped, tag = 'input window, operand 1, single buffered']
    #allocation6 [shape = 's32[1]{0}', space=sflag, size = 0x4, scoped, tag = 'scoped memory for tpu_custom_call.1']
    #allocation7 [shape = 'u8[4096]{0}', space=vmem, size = 0x1000, scoped, tag = 'output window, operand 0, single buffered']
    %7 = vsyncpa [#allocation3], 0
    %8 = vsyncpa [#allocation6], 0
    %9 = vsyncpa [#allocation4], 0
    // Predicated region
    $region2: #{tpu_custom_call.1} parent=1 // pred_check
      _
    $region3: #{tpu_custom_call.1} parent=1 // pred_check_branch
      %11 = sbr.rel (0) target = $region5
    $region4: #{tpu_custom_call.1} parent=1 // pred_region
      %s13 = ssub.s32 64, 64
      %14 = vsyncadd [#allocation3], %s13
      %s16 = sshll.u32 [#allocation2], 4
      %s17 = int_to_ptr.vmem [resolvable:$true] %s16
      %19 = dma.hbm_to_vmem [thread:$0]  %s0, 64, %s17, [#allocation3]
    $region5: #{tpu_custom_call.1} parent=1 // pred_fallthru
      _
    // Predicated region
    $region6: #{tpu_custom_call.1} parent=1 // pred_check
      _
    $region7: #{tpu_custom_call.1} parent=1 // pred_check_branch
      %21 = sbr.rel (0) target = $region9
    $region8: #{tpu_custom_call.1} parent=1 // pred_region
      %s23 = ssub.s32 128, 128
      %24 = vsyncadd [#allocation6], %s23
      %s25 = sshll.u32 [#allocation5], 4
      %s26 = int_to_ptr.vmem [resolvable:$true] %s25
      %31 = dma.hbm_to_vmem [thread:$0]  %s1, 128, %s26, [#allocation6], 64, 64, 4
    $region9: #{tpu_custom_call.1} parent=1 // pred_fallthru
      _
    // Predicated region
    $region10: #{tpu_custom_call.1} parent=1 // pred_check
      _
    $region11: #{tpu_custom_call.1} parent=1 // pred_check_branch
      %33 = sbr.rel (0) target = $region13
    $region12: #{tpu_custom_call.1} parent=1 // pred_region
      %34 = dma.done [#allocation3], 64
    $region13: #{tpu_custom_call.1} parent=1 // pred_fallthru
      _
    // Predicated region
    $region14: #{tpu_custom_call.1} parent=1 // pred_check
      _
    $region15: #{tpu_custom_call.1} parent=1 // pred_check_branch
      %36 = sbr.rel (0) target = $region17
    $region16: #{tpu_custom_call.1} parent=1 // pred_region
      %37 = dma.done [#allocation6], 128
    $region17: #{tpu_custom_call.1} parent=1 // pred_fallthru
      _
    %v39 = vld [vmem:[#allocation2] sm:$0xf]
    %v40 = vld [vmem:[#allocation5] sm:$0xf]
    %v41 = vld [vmem:[#allocation5 + $0x4] sm:$0xf]
    %v44 = vunpack.c.l.b16 %v40
    %v45 = vunpack.c.l.b16 %v41
    %v46 = vpack.c.b16 %v45, %v44
    %vm47 = vcmask 261120
    %v49 = vsel %vm47, %v39, 0
    %v52 = vsel %vm47, %v46, 0
    %54 = vmatprep.subr.bf16.mxu0 0
    %55 = vmatpush1.bf16.xpose.msra.mxu0 0
    %56 = vmatprep.subr.bf16.mxu0 0
    %57 = vmatpush1.bf16.xpose.msra.mxu0 0
    %58 = vmatprep.subr.bf16.mxu0 0
    %59 = vmatpush1.bf16.xpose.msra.mxu0 0
    %60 = vmatprep.subr.bf16.mxu0 0
    %61 = vmatpush1.bf16.xpose.msra.mxu0 0
    %62 = vmatprep.subr.bf16.mxu0 0
    %63 = vmatpush1.bf16.xpose.msra.mxu0 0
    %64 = vmatprep.subr.bf16.mxu0 0
    %65 = vmatpush1.bf16.xpose.msra.mxu0 0
    %66 = vmatprep.subr.bf16.mxu0 0
    %67 = vmatpush1.bf16.xpose.msra.mxu0 0
    %68 = vmatprep.subr.bf16.mxu0 0
    %69 = vmatpush1.bf16.xpose.msra.mxu0 %v52
    %70 = vmatprep.subr.bf16.mxu0 0
    %71 = vmatpush2.bf16.xpose.msra.mxu0 0
    %72 = vmatprep.subr.bf16.mxu0 0
    %73 = vmatpush2.bf16.xpose.msra.mxu0 0
    %74 = vmatprep.subr.bf16.mxu0 0
    %75 = vmatpush2.bf16.xpose.msra.mxu0 0
    %76 = vmatprep.subr.bf16.mxu0 0
    %77 = vmatpush2.bf16.xpose.msra.mxu0 0
    %78 = vmatprep.subr.bf16.mxu0 0
    %79 = vmatpush2.bf16.xpose.msra.mxu0 0
    %80 = vmatprep.subr.bf16.mxu0 0
    %81 = vmatpush2.bf16.xpose.msra.mxu0 0
    %82 = vmatprep.subr.bf16.mxu0 0
    %83 = vmatpush2.bf16.xpose.msra.mxu0 0
    %84 = vmatprep.subr.bf16.mxu0 0
    %85 = vmatpush2.bf16.xpose.msra.mxu0 0
    %86 = vmatprep.mubr.bf16.mxu0 0
    %87 = vmatmul.mubr.bf16.gmra.mxu0 %v49
    %v88 = vpop.f32.mrf.mxu0
    %v89 = vadd.f32 0.0, %v88
    %v90 = vpop.f32.mrf.mxu0
    %v91 = vpop.f32.mrf.mxu0
    %v92 = vpop.f32.mrf.mxu0
    %93 = vdwg.mxu0
    %vm94 = vcmask 130048
    %v95 = vsel %vm94, %v89, -inf
    %v96 = vrot.slane %v95, 4
    %v97 = vmax.f32 %v95, %v96
    %v98 = vrot.slane %v97, 2
    %v99 = vmax.f32 %v97, %v98
    %v100 = vrot.slane %v99, 1
    %v101 = vmax.f32 %v99, %v100
    %v102 = vsub.f32 %v89, %v101
    %v103 = vmul.f32 %v102, 1.442695
    %v104 = vpow.pop %v103
    %v105 = vsel %vm94, %v104, 0.0
    %v106 = vrot.slane %v105, 4
    %v107 = vadd.f32 %v105, %v106
    %v108 = vrot.slane %v107, 2
    %v109 = vadd.f32 %v107, %v108
    %v110 = vrot.slane %v109, 1
    %v111 = vadd.f32 %v109, %v110
    %v112 = vrcp.pop %v111
    %v113 = vmul.f32 %v104, %v112
    %114 = vst.msk [vmem:[#allocation7] sm:$0xff] %vm94, %v113
    // Predicated region
    $region18: #{tpu_custom_call.1} parent=1 // pred_check
      _
    $region19: #{tpu_custom_call.1} parent=1 // pred_check_branch
      %116 = sbr.rel (0) target = $region21
    $region20: #{tpu_custom_call.1} parent=1 // pred_region
      %s118 = ssub.s32 128, 128
      %119 = vsyncadd [#allocation4], %s118
      %s121 = sshll.u32 [#allocation7], 4
      %s122 = int_to_ptr.vmem [resolvable:$true] %s121
      %124 = dma.vmem_to_hbm [thread:$0]  %s122, 128, %s2, [#allocation4]
    $region21: #{tpu_custom_call.1} parent=1 // pred_fallthru
      _
    // Predicated region
    $region22: #{tpu_custom_call.1} parent=1 // pred_check
      _
    $region23: #{tpu_custom_call.1} parent=1 // pred_check_branch
      %126 = sbr.rel (0) target = $region25
    $region24: #{tpu_custom_call.1} parent=1 // pred_region
      %127 = dma.done [#allocation4], 128
    $region25: #{tpu_custom_call.1} parent=1 // pred_fallthru
      _
    %128 = vsyncpa [#allocation3], 1
    %129 = vsyncpa [#allocation6], 1
    %130 = vsyncpa [#allocation4], 1

</llo_original>
